<compile_context>
chip_gen: v5e
topology: v5e:2x2
jax: 0.10.0
libtpu: 0.0.40
codegen_flags: <defaults>
</compile_context>

<pallas_src>
import jax
import jax.numpy as jnp
from jax.experimental import pallas as pl
from jax.experimental.pallas import tpu as pltpu


def _round_up(x: int, m: int) -> int:
    return ((x + m - 1) // m) * m


def specific_layer_kernel(atten_ref, x_ref, gwt_ref, swt_ref, bias_ref,
                          o_ref, acc_ref):
    # atten_ref : SMEM (1, 1)      -- global_weight_atten (scalar)
    # x_ref     : VMEM (tm, tk)    -- input tile
    # gwt_ref   : VMEM (tk, tn)    -- global_weight^T tile   (IN, OUT layout)
    # swt_ref   : VMEM (tk, tn)    -- Specific_weight^T tile (IN, OUT layout)
    # bias_ref  : VMEM (1, tn)     -- Specific_bias tile
    # o_ref     : VMEM (tm, tn)    -- output tile
    # acc_ref   : VMEM (tm, tn) f32 scratch accumulator
    k = pl.program_id(2)

    @pl.when(k == 0)
    def _():
        acc_ref[...] = jnp.zeros_like(acc_ref)

    # Combine weights in f32 (matches PyTorch numerics), cast to the matmul
    # input dtype only at the dot so bf16 activations still hit the fast MXU path.
    atten = atten_ref[0, 0].astype(jnp.float32)
    theta_t = (atten * gwt_ref[...].astype(jnp.float32)
               + swt_ref[...].astype(jnp.float32)).astype(x_ref.dtype)   # (tk, tn)

    acc_ref[...] += jnp.dot(x_ref[...], theta_t,
                            preferred_element_type=jnp.float32)          # (tm, tn)

    @pl.when(k == pl.num_programs(2) - 1)
    def _():
        o_ref[...] = (acc_ref[...]
                      + bias_ref[...].astype(jnp.float32)).astype(o_ref.dtype)


def specific_layer_forward(data, global_weight, global_weight_atten,
                           specific_weight, specific_bias,
                           *, tm_max=256, tn_max=256, tk_max=256):
    """data: (..., IN); weights carry a trailing size-1 axis like the PyTorch module."""
    # ---- wrapper glue: squeeze trailing 1-dim, transpose weights to (IN, OUT),
    #      flatten leading batch dims, pad to tile multiples. -----------------
    gw = jnp.squeeze(global_weight, axis=-1)        # (OUT, IN)
    sw = jnp.squeeze(specific_weight, axis=-1)      # (OUT, IN)
    out_f, in_f = gw.shape
    lead = data.shape[:-1]
    x2d = data.reshape(-1, in_f)                    # (B, IN)
    b = x2d.shape[0]

    if specific_bias is None:
        specific_bias = jnp.zeros((out_f,), dtype=data.dtype)

    # Tile sizes: 256-granular by default (v6e/v7x MXU), shrink for small dims.
    tm = min(tm_max, _round_up(b, 8))
    tn = min(tn_max, _round_up(out_f, 128))
    tk = min(tk_max, _round_up(in_f, 128))

    b_pad = _round_up(b, tm)
    out_pad = _round_up(out_f, tn)
    in_pad = _round_up(in_f, tk)

    x_p = jnp.pad(x2d, ((0, b_pad - b), (0, in_pad - in_f)))
    # Pre-transpose once so OUT is lane-dense inside the kernel (no in-kernel .T).
    gw_t = jnp.pad(gw.T, ((0, in_pad - in_f), (0, out_pad - out_f)))   # (IN_p, OUT_p)
    sw_t = jnp.pad(sw.T, ((0, in_pad - in_f), (0, out_pad - out_f)))   # (IN_p, OUT_p)
    bias_p = jnp.pad(specific_bias.reshape(1, out_f),
                     ((0, 0), (0, out_pad - out_f)))                   # (1, OUT_p)
    atten = global_weight_atten.reshape(-1)[:1].astype(jnp.float32).reshape(1, 1)

    grid = (b_pad // tm, out_pad // tn, in_pad // tk)

    grid_spec = pltpu.PrefetchScalarGridSpec(
        num_scalar_prefetch=0,
        grid=grid,
        in_specs=[
            pl.BlockSpec(memory_space=pltpu.MemorySpace.SMEM),        # atten (1,1)
            pl.BlockSpec((tm, tk), lambda i, j, k: (i, k)),           # x
            pl.BlockSpec((tk, tn), lambda i, j, k: (k, j)),           # gw^T
            pl.BlockSpec((tk, tn), lambda i, j, k: (k, j)),           # sw^T
            pl.BlockSpec((1, tn), lambda i, j, k: (0, j)),            # bias
        ],
        out_specs=pl.BlockSpec((tm, tn), lambda i, j, k: (i, j)),
        scratch_shapes=[pltpu.VMEM((tm, tn), jnp.float32)],
    )

    out_p = pl.pallas_call(
        specific_layer_kernel,
        out_shape=jax.ShapeDtypeStruct((b_pad, out_pad), data.dtype),
        grid_spec=grid_spec,
        compiler_params=pltpu.CompilerParams(
            # IN-reduction is the sole "arbitrary" axis; batch/OUT axes are
            # independent and can shard across v7x's 2 TensorCores.
            dimension_semantics=("parallel", "parallel", "arbitrary"),
            vmem_limit_bytes=64 * 1024 * 1024,
        ),
    )(atten, x_p, gw_t, sw_t, bias_p)

    # TODO(synk): for inference-style reuse of fixed weights, precompute
    # theta = atten*gw + sw once outside and run a plain tiled linear to halve
    # steady-state weight HBM traffic.
    return out_p[:b, :out_f].reshape(*lead, out_f)


if __name__ == "__main__":
    # Small deterministic setup mirroring the module's __init__.
    OUT, IN = 16, 32
    B = 8
    ATTEN_DEFAULT = 0.8

    key = jax.random.PRNGKey(0)
    k_gw, k_bias, k_x = jax.random.split(key, 3)

    # global_weight (OUT, IN) reshaped with trailing 1, as in __init__.
    global_weight = jax.random.normal(k_gw, (OUT, IN), dtype=jnp.float32)
    global_weight = global_weight.reshape(OUT, IN, 1)

    # global_weight_atten defaults to ones(last_dim) * atten_default -> shape (1,)
    global_weight_atten = jnp.ones((1,), dtype=jnp.float32) * ATTEN_DEFAULT

    # Specific_weight = (1 - atten) * global_weight  (same trailing-1 shape)
    specific_weight = (1.0 - global_weight_atten) * global_weight

    # Specific_bias: (OUT,)
    specific_bias = jax.random.normal(k_bias, (OUT,), dtype=jnp.float32)

    # Input data: (B, IN)
    data = jax.random.normal(k_x, (B, IN), dtype=jnp.float32)

    out = specific_layer_forward(data, global_weight, global_weight_atten,
                                 specific_weight, specific_bias)
    out = jax.block_until_ready(out)

    # Pure-JAX reference check (same math as the PyTorch forward).
    theta_ref = (jnp.sum(global_weight_atten * global_weight, axis=-1)
                 + jnp.squeeze(specific_weight, axis=-1))
    ref = data @ theta_ref.T + specific_bias
    assert out.shape == (B, OUT)
    assert jnp.allclose(out, ref, atol=1e-5, rtol=1e-5)

    print("KERNEL_OK")
</pallas_src>

<mosaic_0001>
module attributes {stable_mosaic.version = 11 : i64} {
  func.func @specific_layer_kernel(%arg0: i32, %arg1: i32, %arg2: i32, %arg3: memref<1x1xf32, #tpu.memory_space<smem>>, %arg4: memref<8x128xf32, #tpu.memory_space<vmem>>, %arg5: memref<128x128xf32, #tpu.memory_space<vmem>>, %arg6: memref<128x128xf32, #tpu.memory_space<vmem>>, %arg7: memref<1x128xf32, #tpu.memory_space<vmem>>, %arg8: memref<8x128xf32, #tpu.memory_space<vmem>>, %arg9: memref<8x128xf32, #tpu.memory_space<vmem>>) attributes {dimension_semantics = [#tpu.dimension_semantics<parallel>, #tpu.dimension_semantics<parallel>, #tpu.dimension_semantics<arbitrary>], iteration_bounds = array<i64: 1, 1, 1>, scalar_prefetch = 0 : i64, scratch_operands = 1 : i64, tpu.core_type = #tpu.core_type<tc>, window_params = [{transform_indices = @transform_0, window_bounds = array<i64: 1, 1>}, {transform_indices = @transform_1, window_bounds = array<i64: 8, 128>}, {transform_indices = @transform_2, window_bounds = array<i64: 128, 128>}, {transform_indices = @transform_3, window_bounds = array<i64: 128, 128>}, {transform_indices = @transform_4, window_bounds = array<i64: 1, 128>}, {transform_indices = @transform_5, window_bounds = array<i64: 8, 128>}]} {
    %c0_i32 = arith.constant 0 : i32
    %0 = arith.cmpi eq, %arg2, %c0_i32 : i32
    %1 = arith.extui %0 : i1 to i32
    %c0_i32_0 = arith.constant 0 : i32
    %2 = arith.cmpi ne, %1, %c0_i32_0 : i32
    scf.if %2 {
      %cst_14 = arith.constant 0.000000e+00 : f32
      %17 = vector.broadcast %cst_14 : f32 to vector<8x128xf32>
      %c0_15 = arith.constant 0 : index
      %c0_16 = arith.constant 0 : index
      %18 = vector.load %arg9[%c0_15, %c0_16] : memref<8x128xf32, #tpu.memory_space<vmem>>, vector<8x128xf32>
      tpu.vector_store %arg9[%c0_15, %c0_16], %17 {strides = array<i32>} : memref<8x128xf32, #tpu.memory_space<vmem>>, vector<8x128xf32>,
    } else {
    }
    %c0 = arith.constant 0 : index
    %c0_1 = arith.constant 0 : index
    %3 = memref.load %arg3[%c0, %c0_1] : memref<1x1xf32, #tpu.memory_space<smem>>
    %c0_2 = arith.constant 0 : index
    %c0_3 = arith.constant 0 : index
    %4 = vector.load %arg5[%c0_2, %c0_3] : memref<128x128xf32, #tpu.memory_space<vmem>>, vector<128x128xf32>
    %5 = vector.broadcast %3 : f32 to vector<128x128xf32>
    %6 = arith.mulf %5, %4 : vector<128x128xf32>
    %c0_4 = arith.constant 0 : index
    %c0_5 = arith.constant 0 : index
    %7 = vector.load %arg6[%c0_4, %c0_5] : memref<128x128xf32, #tpu.memory_space<vmem>>, vector<128x128xf32>
    %8 = arith.addf %6, %7 : vector<128x128xf32>
    %c0_6 = arith.constant 0 : index
    %c0_7 = arith.constant 0 : index
    %9 = vector.load %arg9[%c0_6, %c0_7] : memref<8x128xf32, #tpu.memory_space<vmem>>, vector<8x128xf32>
    %c0_8 = arith.constant 0 : index
    %c0_9 = arith.constant 0 : index
    %10 = vector.load %arg4[%c0_8, %c0_9] : memref<8x128xf32, #tpu.memory_space<vmem>>, vector<8x128xf32>
    %cst = arith.constant dense<0.000000e+00> : vector<8x128xf32>
    %11 = tpu.matmul %10, %8, %cst {dimension_numbers = #tpu.dot_dimension_numbers<[1], [0], [0], [1], [0, 0, 1, 1], [], []>} : vector<8x128xf32>, vector<128x128xf32>, vector<8x128xf32> -> vector<8x128xf32>
    %12 = arith.addf %9, %11 : vector<8x128xf32>
    %c0_10 = arith.constant 0 : index
    %c0_11 = arith.constant 0 : index
    %13 = vector.load %arg9[%c0_10, %c0_11] : memref<8x128xf32, #tpu.memory_space<vmem>>, vector<8x128xf32>
    tpu.vector_store %arg9[%c0_10, %c0_11], %12 {strides = array<i32>} : memref<8x128xf32, #tpu.memory_space<vmem>>, vector<8x128xf32>,
    %c0_i32_12 = arith.constant 0 : i32
    %14 = arith.cmpi eq, %arg2, %c0_i32_12 : i32
    %15 = arith.extui %14 : i1 to i32
    %c0_i32_13 = arith.constant 0 : i32
    %16 = arith.cmpi ne, %15, %c0_i32_13 : i32
    scf.if %16 {
      %c0_14 = arith.constant 0 : index
      %c0_15 = arith.constant 0 : index
      %17 = vector.load %arg9[%c0_14, %c0_15] : memref<8x128xf32, #tpu.memory_space<vmem>>, vector<8x128xf32>
      %c0_16 = arith.constant 0 : index
      %c0_17 = arith.constant 0 : index
      %18 = vector.load %arg7[%c0_16, %c0_17] : memref<1x128xf32, #tpu.memory_space<vmem>>, vector<1x128xf32>
      %19 = vector.broadcast %18 : vector<1x128xf32> to vector<8x128xf32>
      %20 = arith.addf %17, %19 : vector<8x128xf32>
      %c0_18 = arith.constant 0 : index
      %c0_19 = arith.constant 0 : index
      %21 = vector.load %arg8[%c0_18, %c0_19] : memref<8x128xf32, #tpu.memory_space<vmem>>, vector<8x128xf32>
      tpu.vector_store %arg8[%c0_18, %c0_19], %20 {strides = array<i32>} : memref<8x128xf32, #tpu.memory_space<vmem>>, vector<8x128xf32>,
    } else {
    }
    return
  }
  func.func @transform_0(%arg0: i32, %arg1: i32, %arg2: i32) -> (i32, i32) {
    %c0_i32 = arith.constant 0 : i32
    %c0_i32_0 = arith.constant 0 : i32
    %c0_i32_1 = arith.constant 0 : i32
    return %c0_i32, %c0_i32_0 : i32, i32
  }
  func.func @transform_1(%arg0: i32, %arg1: i32, %arg2: i32) -> (i32, i32) {
    %c0_i32 = arith.constant 0 : i32
    return %arg0, %arg2 : i32, i32
  }
  func.func @transform_2(%arg0: i32, %arg1: i32, %arg2: i32) -> (i32, i32) {
    %c0_i32 = arith.constant 0 : i32
    return %arg2, %arg1 : i32, i32
  }
  func.func @transform_3(%arg0: i32, %arg1: i32, %arg2: i32) -> (i32, i32) {
    %c0_i32 = arith.constant 0 : i32
    return %arg2, %arg1 : i32, i32
  }
  func.func @transform_4(%arg0: i32, %arg1: i32, %arg2: i32) -> (i32, i32) {
    %c0_i32 = arith.constant 0 : i32
    %c0_i32_0 = arith.constant 0 : i32
    return %c0_i32, %arg1 : i32, i32
  }
  func.func @transform_5(%arg0: i32, %arg1: i32, %arg2: i32) -> (i32, i32) {
    %c0_i32 = arith.constant 0 : i32
    return %arg0, %arg1 : i32, i32
  }
}

</mosaic_0001>

<llo_original>
// kernel: tpu_custom_call.1
$region0: #{tpu_custom_call.1}
  #allocation0 [shape = 'u32[]', space=smem, size = 0x4, offset = 0x4, fixed_abs, tag = 'smem constant byte address 0x4 - core index']
  #allocation1 [shape = 'u32[72,128]{1,0:T(1,128)}', space=vmem, size = 0x9000, scoped, tag = 'internal scratch']
  #allocation2 [shape = 'f32[8,128]{1,0:T(8,128)}', space=vmem, size = 0x1000, scoped, tag = 'scratch operand']
  #allocation3 [shape = 'f32[1,1]{1,0:T(1,128)S(6)}', space=smem, size = 0x200, scoped, tag = 'scoped memory for tpu_custom_call.1']
  %s0 = inlined_call_operand.<no memory space> [shape: f32[1,1], index: 0, kind: input, shape index: {}]
  %s1 = inlined_call_operand.hbm [shape: f32[8,128], index: 1, kind: input, shape index: {}]
  %s2 = inlined_call_operand.hbm [shape: f32[128,128], index: 2, kind: input, shape index: {}]
  %s3 = inlined_call_operand.hbm [shape: f32[128,128], index: 3, kind: input, shape index: {}]
  %s4 = inlined_call_operand.vmem [shape: f32[1,128], index: 4, kind: input, shape index: {}]
  %s5 = inlined_call_operand.hbm [shape: f32[8,128], index: 5, kind: output, shape index: {}]
  %s6 = sld [smem:[#allocation0]]
  $region50: #{tpu_custom_call.1} parent=0
    _
  %s8 = ssub.s32 1, %s6
  %s9 = scalar_select 0, %s8, %s6
  %10 = sst [smem:[#allocation3]] %s0
  $region1: #{tpu_custom_call.1} parent=0
    #allocation4 [shape = 'u8[4096]{0}', space=vmem, size = 0x1000, scoped, tag = 'input window, operand 1, single buffered']
    #allocation5 [shape = 's32[1]{0}', space=sflag, size = 0x4, scoped, tag = 'scoped memory for tpu_custom_call.1']
    #allocation6 [shape = 's32[1]{0}', space=sflag, size = 0x4, scoped, tag = 'scoped memory for tpu_custom_call.1']
    #allocation7 [shape = 'u8[65536]{0}', space=vmem, size = 0x10000, scoped, tag = 'input window, operand 2, single buffered']
    #allocation8 [shape = 's32[1]{0}', space=sflag, size = 0x4, scoped, tag = 'scoped memory for tpu_custom_call.1']
    #allocation9 [shape = 'u8[65536]{0}', space=vmem, size = 0x10000, scoped, tag = 'input window, operand 3, single buffered']
    #allocation10 [shape = 'u8[4096]{0}', space=vmem, size = 0x1000, scoped, tag = 'output window, operand 0, single buffered']
    %11 = vsyncpa [#allocation5], 0
    %12 = vsyncpa [#allocation8], 0
    %13 = vsyncpa [#allocation6], 0
    // Predicated region
    $region2: #{tpu_custom_call.1} parent=1 // pred_check
      _
    $region3: #{tpu_custom_call.1} parent=1 // pred_check_branch
      %15 = sbr.rel (0) target = $region5
    $region4: #{tpu_custom_call.1} parent=1 // pred_region
      _
    $region5: #{tpu_custom_call.1} parent=1 // pred_fallthru
      _
    // Predicated region
    $region6: #{tpu_custom_call.1} parent=1 // pred_check
      _
    $region7: #{tpu_custom_call.1} parent=1 // pred_check_branch
      %17 = sbr.rel (0) target = $region9
    $region8: #{tpu_custom_call.1} parent=1 // pred_region
      %19 = vsyncadd [#allocation5], 0
      %s21 = sshll.u32 %s1, 4
      %s22 = int_to_ptr.hbm [resolvable:$true] %s21
      %s23 = sshll.u32 [#allocation4], 4
      %s24 = int_to_ptr.vmem [resolvable:$true] %s23
      %26 = dma.hbm_to_vmem [thread:$0]  %s22, 128, %s24, [#allocation5]
    $region9: #{tpu_custom_call.1} parent=1 // pred_fallthru
      _
    // Predicated region
    $region10: #{tpu_custom_call.1} parent=1 // pred_check
      _
    $region11: #{tpu_custom_call.1} parent=1 // pred_check_branch
      %28 = sbr.rel (0) target = $region13
    $region12: #{tpu_custom_call.1} parent=1 // pred_region
      %30 = vsyncadd [#allocation8], 0
      %s31 = sshll.u32 %s2, 4
      %s32 = int_to_ptr.hbm [resolvable:$true] %s31
      %s33 = sshll.u32 [#allocation7], 4
      %s34 = int_to_ptr.vmem [resolvable:$true] %s33
      %39 = dma.hbm_to_vmem [thread:$0]  %s32, 2048, %s34, [#allocation8], 128, 128, 8
    $region13: #{tpu_custom_call.1} parent=1 // pred_fallthru
      _
    // Predicated region
    $region14: #{tpu_custom_call.1} parent=1 // pred_check
      _
    $region15: #{tpu_custom_call.1} parent=1 // pred_check_branch
      %41 = sbr.rel (0) target = $region17
    $region16: #{tpu_custom_call.1} parent=1 // pred_region
      %43 = vsyncadd [#allocation8], 0
      %s44 = sshll.u32 %s3, 4
      %s45 = int_to_ptr.hbm [resolvable:$true] %s44
      %s46 = sshll.u32 [#allocation9], 4
      %s47 = int_to_ptr.vmem [resolvable:$true] %s46
      %52 = dma.hbm_to_vmem [thread:$0]  %s45, 2048, %s47, [#allocation8], 128, 128, 8
    $region17: #{tpu_custom_call.1} parent=1 // pred_fallthru
      _
    // Predicated region
    $region18: #{tpu_custom_call.1} parent=1 // pred_check
      _
    $region19: #{tpu_custom_call.1} parent=1 // pred_check_branch
      %54 = sbr.rel (0) target = $region21
    $region20: #{tpu_custom_call.1} parent=1 // pred_region
      _
    $region21: #{tpu_custom_call.1} parent=1 // pred_fallthru
      _
    // Predicated region
    $region22: #{tpu_custom_call.1} parent=1 // pred_check
      _
    $region23: #{tpu_custom_call.1} parent=1 // pred_check_branch
      %56 = sbr.rel (0) target = $region25
    $region24: #{tpu_custom_call.1} parent=1 // pred_region
      %58 = dma.done [#allocation5], 128
    $region25: #{tpu_custom_call.1} parent=1 // pred_fallthru
      _
    // Predicated region
    $region26: #{tpu_custom_call.1} parent=1 // pred_check
      _
    $region27: #{tpu_custom_call.1} parent=1 // pred_check_branch
      %60 = sbr.rel (0) target = $region29
    $region28: #{tpu_custom_call.1} parent=1 // pred_region
      %62 = dma.done [#allocation8], 2048
    $region29: #{tpu_custom_call.1} parent=1 // pred_fallthru
      _
    // Predicated region
    $region30: #{tpu_custom_call.1} parent=1 // pred_check
      _
    $region31: #{tpu_custom_call.1} parent=1 // pred_check_branch
      %64 = sbr.rel (0) target = $region33
    $region32: #{tpu_custom_call.1} parent=1 // pred_region
      %66 = dma.done [#allocation8], 2048
    $region33: #{tpu_custom_call.1} parent=1 // pred_fallthru
      _
    %p67 = scmp.eq.s32.totalorder 0, 0
    // Predicated region
    $region34: #{tpu_custom_call.1} parent=1 // pred_check
      %p68 = pneg %p67
    $region35: #{tpu_custom_call.1} parent=1 // pred_check_branch
      %70 = sbr.rel (%p68) target = $region37
    $region36: #{tpu_custom_call.1} parent=1 // pred_region
      %71 = vst [vmem:[#allocation2] sm:$0xff] 0.0
    $region37: #{tpu_custom_call.1} parent=1 // pred_fallthru
      _
    %s72 = sld [smem:[#allocation3]]
    %v73 = vld [vmem:[#allocation7] sm:$0xff]
    %v74 = vld [vmem:[#allocation7 + $0x8] sm:$0xff]
    %v75 = vld [vmem:[#allocation7 + $0x10] sm:$0xff]
    %v76 = vld [vmem:[#allocation7 + $0x18] sm:$0xff]
    %v77 = vld [vmem:[#allocation7 + $0x20] sm:$0xff]
    %v78 = vld [vmem:[#allocation7 + $0x28] sm:$0xff]
    %v79 = vld [vmem:[#allocation7 + $0x30] sm:$0xff]
    %v80 = vld [vmem:[#allocation7 + $0x38] sm:$0xff]
    %v81 = vld [vmem:[#allocation7 + $0x40] sm:$0xff]
    %v82 = vld [vmem:[#allocation7 + $0x48] sm:$0xff]
    %v83 = vld [vmem:[#allocation7 + $0x50] sm:$0xff]
    %v84 = vld [vmem:[#allocation7 + $0x58] sm:$0xff]
    %v85 = vld [vmem:[#allocation7 + $0x60] sm:$0xff]
    %v86 = vld [vmem:[#allocation7 + $0x68] sm:$0xff]
    %v87 = vld [vmem:[#allocation7 + $0x70] sm:$0xff]
    %v88 = vld [vmem:[#allocation7 + $0x78] sm:$0xff]
    %v89 = vstv %s72
    %v90 = vmul.f32 %v89, %v73
    %v91 = vmul.f32 %v89, %v74
    %v92 = vmul.f32 %v89, %v75
    %v93 = vmul.f32 %v89, %v76
    %v94 = vmul.f32 %v89, %v77
    %v95 = vmul.f32 %v89, %v78
    %v96 = vmul.f32 %v89, %v79
    %v97 = vmul.f32 %v89, %v80
    %v98 = vmul.f32 %v89, %v81
    %v99 = vmul.f32 %v89, %v82
    %v100 = vmul.f32 %v89, %v83
    %v101 = vmul.f32 %v89, %v84
    %v102 = vmul.f32 %v89, %v85
    %v103 = vmul.f32 %v89, %v86
    %v104 = vmul.f32 %v89, %v87
    %v105 = vmul.f32 %v89, %v88
    %v106 = vld [vmem:[#allocation9] sm:$0xff]
    %v107 = vld [vmem:[#allocation9 + $0x8] sm:$0xff]
    %v108 = vld [vmem:[#allocation9 + $0x10] sm:$0xff]
    %v109 = vld [vmem:[#allocation9 + $0x18] sm:$0xff]
    %v110 = vld [vmem:[#allocation9 + $0x20] sm:$0xff]
    %v111 = vld [vmem:[#allocation9 + $0x28] sm:$0xff]
    %v112 = vld [vmem:[#allocation9 + $0x30] sm:$0xff]
    %v113 = vld [vmem:[#allocation9 + $0x38] sm:$0xff]
    %v114 = vld [vmem:[#allocation9 + $0x40] sm:$0xff]
    %v115 = vld [vmem:[#allocation9 + $0x48] sm:$0xff]
    %v116 = vld [vmem:[#allocation9 + $0x50] sm:$0xff]
    %v117 = vld [vmem:[#allocation9 + $0x58] sm:$0xff]
    %v118 = vld [vmem:[#allocation9 + $0x60] sm:$0xff]
    %v119 = vld [vmem:[#allocation9 + $0x68] sm:$0xff]
    %v120 = vld [vmem:[#allocation9 + $0x70] sm:$0xff]
    %v121 = vld [vmem:[#allocation9 + $0x78] sm:$0xff]
    %v122 = vadd.f32 %v90, %v106
    %v123 = vadd.f32 %v91, %v107
    %v124 = vadd.f32 %v92, %v108
    %v125 = vadd.f32 %v93, %v109
    %v126 = vadd.f32 %v94, %v110
    %v127 = vadd.f32 %v95, %v111
    %v128 = vadd.f32 %v96, %v112
    %v129 = vadd.f32 %v97, %v113
    %v130 = vadd.f32 %v98, %v114
    %v131 = vadd.f32 %v99, %v115
    %v132 = vadd.f32 %v100, %v116
    %v133 = vadd.f32 %v101, %v117
    %v134 = vadd.f32 %v102, %v118
    %v135 = vadd.f32 %v103, %v119
    %v136 = vadd.f32 %v104, %v120
    %v137 = vadd.f32 %v105, %v121
    %v138 = vld [vmem:[#allocation2] sm:$0xff]
    %v139 = vld [vmem:[#allocation4] sm:$0xff]
    %140 = vmatpush.msra.mxu0 %v137
    %141 = vmatpush.msra.mxu0 %v136
    %142 = vmatpush.msra.mxu0 %v135
    %143 = vmatpush.msra.mxu0 %v134
    %144 = vmatpush.msra.mxu0 %v133
    %145 = vmatpush.msra.mxu0 %v132
    %146 = vmatpush.msra.mxu0 %v131
    %147 = vmatpush.msra.mxu0 %v130
    %148 = vmatpush.msra.mxu0 %v129
    %149 = vmatpush.msra.mxu0 %v128
    %150 = vmatpush.msra.mxu0 %v127
    %151 = vmatpush.msra.mxu0 %v126
    %152 = vmatpush.msra.mxu0 %v125
    %153 = vmatpush.msra.mxu0 %v124
    %154 = vmatpush.msra.mxu0 %v123
    %155 = vmatpush.msra.mxu0 %v122
    %156 = vmatmul.f32.gmra.mxu0 %v139
    %v157 = vpop.f32.mrf.mxu0
    %v158 = vadd.f32 0.0, %v157
    %159 = vdwg.mxu0
    %v160 = vadd.f32 %v138, %v158
    %161 = vst [vmem:[#allocation2] sm:$0xff] %v160
    // Predicated region
    $region38: #{tpu_custom_call.1} parent=1 // pred_check
      %p162 = pneg %p67
    $region39: #{tpu_custom_call.1} parent=1 // pred_check_branch
      %164 = sbr.rel (%p162) target = $region41
    $region40: #{tpu_custom_call.1} parent=1 // pred_region
      %v165 = vld [vmem:[#allocation2] sm:$0xff]
      %v166 = vld [vmem:[%s4] sm:$0x1]
      %v168 = vperm.slane %v166, 0
      %v170 = vadd.f32 %v165, %v168
      %171 = vst [vmem:[#allocation10] sm:$0xff] %v170
    $region41: #{tpu_custom_call.1} parent=1 // pred_fallthru
      _
    // Predicated region
    $region42: #{tpu_custom_call.1} parent=1 // pred_check
      _
    $region43: #{tpu_custom_call.1} parent=1 // pred_check_branch
      %173 = sbr.rel (0) target = $region45
    $region44: #{tpu_custom_call.1} parent=1 // pred_region
      %175 = vsyncadd [#allocation6], 0
      %s177 = sshll.u32 [#allocation10], 4
      %s178 = int_to_ptr.vmem [resolvable:$true] %s177
      %s179 = sshll.u32 %s5, 4
      %s180 = int_to_ptr.hbm [resolvable:$true] %s179
      %182 = dma.vmem_to_hbm [thread:$0]  %s178, 128, %s180, [#allocation6]
    $region45: #{tpu_custom_call.1} parent=1 // pred_fallthru
      _
    // Predicated region
    $region46: #{tpu_custom_call.1} parent=1 // pred_check
      _
    $region47: #{tpu_custom_call.1} parent=1 // pred_check_branch
      %184 = sbr.rel (0) target = $region49
    $region48: #{tpu_custom_call.1} parent=1 // pred_region
      %186 = dma.done [#allocation6], 128
    $region49: #{tpu_custom_call.1} parent=1 // pred_fallthru
      _
    %187 = vsyncpa [#allocation5], 1
    %188 = vsyncpa [#allocation8], 1
    %189 = vsyncpa [#allocation6], 1

</llo_original>
